<compile_context>
chip_gen: v7x
topology: tpu7x:2x2x1
jax: 0.10.0
libtpu: 0.0.40
codegen_flags: <defaults>
</compile_context>

<pallas_src>
import functools

import numpy as np
import jax
import jax.numpy as jnp
from jax.experimental import pallas as pl
from jax.experimental.pallas import tpu as pltpu


def _round_up(x, m):
    return ((x + m - 1) // m) * m


def _focal_loss_kernel(x_ref, t_ref, *rest,
                       gamma, use_alpha, hw_valid, tile_hw, needs_mask):
    if use_alpha:
        alpha_ref, out_ref, acc_ref = rest
    else:
        out_ref, acc_ref = rest

    j = pl.program_id(1)
    nj = pl.num_programs(1)

    # Zero the lane-dense per-batch accumulator at the start of every batch.
    @pl.when(j == 0)
    def _():
        acc_ref[...] = jnp.zeros_like(acc_ref)

    x = x_ref[...].astype(jnp.float32)            # (C, T) logits
    t = t_ref[...].astype(jnp.int32)              # (1, T) targets (int8 in HBM)

    # Numerically-stable softmax pieces over the class (sublane) axis.
    m = jnp.max(x, axis=0, keepdims=True)                         # (1, T)
    e = jnp.exp(x - m)                                            # (C, T)
    se = jnp.sum(e, axis=0, keepdims=True)                        # (1, T)

    cls = jax.lax.broadcasted_iota(jnp.int32, x.shape, 0)         # (C, T)
    onehot = cls == t                                             # bool (C, T)
    # Gather the target logit / exp with selects (no cast+mul, no full logp).
    x_t = jnp.sum(jnp.where(onehot, x, 0.0), axis=0, keepdims=True)
    e_t = jnp.sum(jnp.where(onehot, e, 0.0), axis=0, keepdims=True)

    logpt = x_t - m - jnp.log(se)                                 # (1, T)
    pt = e_t / se               # == exp(logpt); reuses e, one fewer EUP exp

    if use_alpha:
        a_col = alpha_ref[...][:, 0:1]                            # (C, 1)
        at = jnp.sum(jnp.where(onehot, a_col, 0.0), axis=0, keepdims=True)
        logpt = logpt * at

    # Focal modulation: integer gamma uses plain VPU multiplies (no pow/EUP).
    gi = int(round(gamma))
    w = jnp.maximum(1.0 - pt, 0.0)     # clamp: avoid NaN for fractional gamma
    if abs(gamma - gi) < 1e-12 and 0 <= gi <= 8:
        if gi == 0:
            focal = jnp.ones_like(pt)
        else:
            focal = w
            for _ in range(gi - 1):
                focal = focal * w
    else:
        focal = w ** gamma

    loss = -1.0 * focal * logpt                                   # (1, T)

    # Lane-dense elementwise accumulation (VPU only).  The padding mask is a
    # select (NaN-safe) and only runs on the tail tile.
    if needs_mask:
        @pl.when(j < nj - 1)
        def _():
            acc_ref[...] += loss

        @pl.when(j == nj - 1)
        def _():
            col = jax.lax.broadcasted_iota(jnp.int32, (1, tile_hw), 1) + j * tile_hw
            acc_ref[...] += jnp.where(col < hw_valid, loss, 0.0)
    else:
        acc_ref[...] += loss

    # Per-batch epilogue: single cross-lane reduce, broadcast into the
    # (8, 128)-padded per-batch partial slab.
    @pl.when(j == nj - 1)
    def _():
        out_ref[...] = jnp.broadcast_to(jnp.sum(acc_ref[...]), out_ref.shape)


def focal_loss(logits_nchw, target_bhw, *, gamma=0.0, alpha=None,
               size_average=True, tile_hw=None):
    """Pallas implementation of FocalLoss.forward.

    logits_nchw: [B, C, H, W] float logits (upcast to f32 in-kernel; feed bf16
                 upstream if accuracy allows -- halves the dominant HBM stream).
    target_bhw:  [B, H, W] integer class indices in [0, C).
    alpha: None, scalar (-> [alpha, 1-alpha] like the PyTorch module), or a
           per-class list/array.  NOTE: classes beyond len(alpha) get weight 0
           (PyTorch would raise instead).
    Returns a scalar (mean if size_average else sum).
    """
    B, C, H, W = logits_nchw.shape
    HW = H * W
    # Free reshape of contiguous NCHW -- no extra HBM pass over the logits.
    x3 = logits_nchw.reshape(B, C, HW)
    t_dtype = jnp.int8 if C <= 127 else jnp.int32   # 4x smaller target stream
    t3 = target_bhw.reshape(B, 1, HW).astype(t_dtype)

    # ---- alpha handling (mirrors the PyTorch module) ----
    use_alpha = alpha is not None
    alpha_vec = None
    if use_alpha:
        if isinstance(alpha, (float, int)) and not isinstance(alpha, bool):
            alpha_vec = np.asarray([alpha, 1.0 - alpha], dtype=np.float32)
        else:
            alpha_vec = np.asarray(alpha, dtype=np.float32).reshape(-1)
        if alpha_vec.shape[0] < C:
            alpha_vec = np.pad(alpha_vec, (0, C - alpha_vec.shape[0]))
        alpha_vec = alpha_vec[:C]

    # ---- per-chip VMEM accounting for tile selection ----
    try:
        info = pltpu.get_tpu_info()
        vmem_cap = int(getattr(info, "vmem_capacity_bytes", 64 << 20))
    except Exception:
        vmem_cap = 64 << 20   # conservative fallback (v7x per-core VMEM)

    def _pad8(n):
        return _round_up(max(int(n), 1), 8)

    itemsize = jnp.dtype(x3.dtype).itemsize
    # Resident VMEM bytes per lane of tile_hw:
    #   logits block : pad8(C) sublanes * itemsize, double-buffered
    #   target block : pads to a full 32 B sublane column (int8 or int32), x2
    #   acc scratch  : (1, tile) f32 padded to 8 sublanes, single buffer
    per_lane = 2 * _pad8(C) * itemsize + 2 * 32 + 32

    budget = min(int(vmem_cap * 0.7), 80 << 20) - (2 << 20)  # headroom (alpha, consts)
    if tile_hw is None:
        max_lanes = max(128, (budget // per_lane) // 128 * 128)
        max_lanes = min(max_lanes, 32768)   # >=512 lanes already ~85%+ of HBM roofline
        tile_hw = min(_round_up(HW, 128), max_lanes)
    tile_hw = max(128, (tile_hw // 128) * 128)

    nj = pl.cdiv(HW, tile_hw)
    needs_mask = (HW % tile_hw) != 0

    footprint = per_lane * tile_hw + 2 * _pad8(C) * 128 * 4 + (1 << 20)
    vmem_limit = int(min(vmem_cap - (4 << 20),
                         max(32 << 20, footprint + (8 << 20))))

    kernel = functools.partial(
        _focal_loss_kernel,
        gamma=float(gamma),
        use_alpha=use_alpha,
        hw_valid=HW,
        tile_hw=tile_hw,
        needs_mask=needs_mask,
    )

    in_specs = [
        pl.BlockSpec((None, C, tile_hw), lambda b, j: (b, 0, j)),
        pl.BlockSpec((None, 1, tile_hw), lambda b, j: (b, 0, j)),
    ]
    inputs = [x3, t3]
    if use_alpha:
        # Tiny lane-aligned constant; broadcast against the onehot mask in-kernel.
        alpha_arr = jnp.broadcast_to(
            jnp.asarray(alpha_vec, dtype=jnp.float32)[:, None], (C, 128))
        in_specs.append(pl.BlockSpec((C, 128), lambda b, j: (0, 0)))
        inputs.append(alpha_arr)

    # TODO(synk): for B == 1 (or tiny-HW / huge-B shapes), split the spatial
    # axis into a leading "parallel" axis / block the batch dim so both v7x
    # TensorCores (and the 0.35 us grid-step overhead) are used optimally.
    partials = pl.pallas_call(
        kernel,
        out_shape=jax.ShapeDtypeStruct((B, 8, 128), jnp.float32),
        grid_spec=pltpu.PrefetchScalarGridSpec(
            num_scalar_prefetch=0,
            grid=(B, nj),
            in_specs=in_specs,
            out_specs=pl.BlockSpec((None, 8, 128), lambda b, j: (b, 0, 0)),
            scratch_shapes=[pltpu.VMEM((1, tile_hw), jnp.float32)],
        ),
        compiler_params=pltpu.CompilerParams(
            dimension_semantics=("parallel", "arbitrary"),
            vmem_limit_bytes=vmem_limit,
        ),
    )(*inputs)

    total = jnp.sum(partials[:, 0, 0])
    if size_average:
        total = total / jnp.float32(B * HW)
    return total


def focal_loss_reference(logits_nchw, target_bhw, *, gamma=0.0, alpha=None,
                         size_average=True):
    B, C, H, W = logits_nchw.shape
    x = jnp.transpose(logits_nchw, (0, 2, 3, 1)).reshape(-1, C).astype(jnp.float32)
    t = target_bhw.reshape(-1).astype(jnp.int32)
    logp = jax.nn.log_softmax(x, axis=1)
    logpt = jnp.take_along_axis(logp, t[:, None], axis=1)[:, 0]
    pt = jnp.exp(logpt)
    if alpha is not None:
        if isinstance(alpha, (float, int)) and not isinstance(alpha, bool):
            alpha_vec = jnp.asarray([alpha, 1.0 - alpha], dtype=jnp.float32)
        else:
            alpha_vec = jnp.asarray(alpha, dtype=jnp.float32).reshape(-1)
        if alpha_vec.shape[0] < C:
            alpha_vec = jnp.pad(alpha_vec, (0, C - alpha_vec.shape[0]))
        at = alpha_vec[:C][t]
        logpt = logpt * at
    loss = -1.0 * (1.0 - pt) ** gamma * logpt
    return loss.mean() if size_average else loss.sum()


if __name__ == "__main__":
    key = jax.random.PRNGKey(0)
    k1, k2, k3, k4 = jax.random.split(key, 4)

    # Case 1: NCHW logits, per-class alpha list, gamma=2 (integer fast path),
    # mean reduction.
    B, C, H, W = 2, 4, 16, 16
    gamma = 2.0
    alpha = [0.1, 0.2, 0.3, 0.4]
    logits = jax.random.normal(k1, (B, C, H, W), dtype=jnp.float32)
    target = jax.random.randint(k2, (B, H, W), 0, C, dtype=jnp.int32)

    out = focal_loss(logits, target, gamma=gamma, alpha=alpha, size_average=True)
    out = jax.block_until_ready(out)
    ref = focal_loss_reference(logits, target, gamma=gamma, alpha=alpha,
                               size_average=True)
    assert jnp.allclose(out, ref, rtol=1e-5, atol=1e-6), (out, ref)

    # Case 2: ragged spatial size (5x7 -> tail-masked 128-lane tile, no
    # wrapper pad), no alpha, gamma=0, sum reduction.
    B2, C2, H2, W2 = 2, 3, 5, 7
    logits2 = jax.random.normal(k3, (B2, C2, H2, W2), dtype=jnp.float32)
    target2 = jax.random.randint(k4, (B2, H2, W2), 0, C2, dtype=jnp.int32)

    out2 = focal_loss(logits2, target2, gamma=0.0, alpha=None, size_average=False)
    out2 = jax.block_until_ready(out2)
    ref2 = focal_loss_reference(logits2, target2, gamma=0.0, alpha=None,
                                size_average=False)
    assert jnp.allclose(out2, ref2, rtol=1e-5, atol=1e-5), (out2, ref2)

    # Case 3: fractional gamma (pow path with the (1-pt) clamp), mean reduction.
    out3 = focal_loss(logits2, target2, gamma=1.5, alpha=None, size_average=True)
    out3 = jax.block_until_ready(out3)
    ref3 = focal_loss_reference(logits2, target2, gamma=1.5, alpha=None,
                                size_average=True)
    assert jnp.allclose(out3, ref3, rtol=1e-5, atol=1e-6), (out3, ref3)

    print("KERNEL_OK")
</pallas_src>

<mosaic_0001>
module attributes {stable_mosaic.version = 11 : i64} {
  func.func @_focal_loss_kernel(%arg0: i32, %arg1: i32, %arg2: memref<1x4x256xf32, #tpu.memory_space<vmem>>, %arg3: memref<1x1x256xi8, #tpu.memory_space<vmem>>, %arg4: memref<4x128xf32, #tpu.memory_space<vmem>>, %arg5: memref<1x8x128xf32, #tpu.memory_space<vmem>>, %arg6: memref<1x256xf32, #tpu.memory_space<vmem>>) attributes {dimension_semantics = [#tpu.dimension_semantics<parallel>, #tpu.dimension_semantics<arbitrary>], iteration_bounds = array<i64: 2, 1>, scalar_prefetch = 0 : i64, scratch_operands = 1 : i64, tpu.core_type = #tpu.core_type<tc>, window_params = [{transform_indices = @transform_0, window_bounds = array<i64: 1, 4, 256>}, {transform_indices = @transform_1, window_bounds = array<i64: 1, 1, 256>}, {pipeline_mode = #tpu.pipeline_mode<synchronous>, transform_indices = @transform_2, window_bounds = array<i64: 4, 128>}, {transform_indices = @transform_3, window_bounds = array<i64: 1, 8, 128>}]} {
    %c0_i32 = arith.constant 0 : i32
    %0 = arith.cmpi eq, %arg1, %c0_i32 : i32
    %1 = arith.extui %0 : i1 to i32
    %c0_i32_0 = arith.constant 0 : i32
    %2 = arith.cmpi ne, %1, %c0_i32_0 : i32
    scf.if %2 {
      %cst_24 = arith.constant 0.000000e+00 : f32
      %53 = vector.broadcast %cst_24 : f32 to vector<1x256xf32>
      %c0_25 = arith.constant 0 : index
      %c0_26 = arith.constant 0 : index
      %54 = vector.load %arg6[%c0_25, %c0_26] : memref<1x256xf32, #tpu.memory_space<vmem>>, vector<1x256xf32>
      tpu.vector_store %arg6[%c0_25, %c0_26], %53 {strides = array<i32>} : memref<1x256xf32, #tpu.memory_space<vmem>>, vector<1x256xf32>,
    } else {
    }
    %c0 = arith.constant 0 : index
    %c0_1 = arith.constant 0 : index
    %c0_2 = arith.constant 0 : index
    %3 = vector.load %arg2[%c0, %c0_1, %c0_2] : memref<1x4x256xf32, #tpu.memory_space<vmem>>, vector<1x4x256xf32>
    %4 = vector.shape_cast %3 : vector<1x4x256xf32> to vector<4x256xf32>
    %c0_3 = arith.constant 0 : index
    %c0_4 = arith.constant 0 : index
    %c0_5 = arith.constant 0 : index
    %5 = vector.load %arg3[%c0_3, %c0_4, %c0_5] : memref<1x1x256xi8, #tpu.memory_space<vmem>>, vector<1x1x256xi8>
    %6 = vector.shape_cast %5 : vector<1x1x256xi8> to vector<1x256xi8>
    %7 = arith.extsi %6 : vector<1x256xi8> to vector<1x256xi32>
    %cst = arith.constant dense<0xFF800000> : vector<256xf32>
    %8 = vector.multi_reduction <maximumf>, %4, %cst [0] : vector<4x256xf32> to vector<256xf32>
    %9 = vector.shape_cast %8 : vector<256xf32> to vector<1x256xf32>
    %10 = vector.broadcast %9 : vector<1x256xf32> to vector<4x256xf32>
    %11 = arith.subf %4, %10 : vector<4x256xf32>
    %12 = math.exp %11 : vector<4x256xf32>
    %cst_6 = arith.constant dense<0.000000e+00> : vector<256xf32>
    %13 = vector.multi_reduction <add>, %12, %cst_6 [0] : vector<4x256xf32> to vector<256xf32>
    %14 = vector.shape_cast %13 : vector<256xf32> to vector<1x256xf32>
    %15 = tpu.iota {dimensions = array<i32: 0>} : vector<4x256xi32>
    %16 = vector.broadcast %7 : vector<1x256xi32> to vector<4x256xi32>
    %17 = arith.cmpi eq, %15, %16 : vector<4x256xi32>
    %cst_7 = arith.constant 0.000000e+00 : f32
    %18 = vector.broadcast %cst_7 : f32 to vector<4x256xf32>
    %19 = arith.select %17, %4, %18 : vector<4x256xi1>, vector<4x256xf32>
    %cst_8 = arith.constant dense<0.000000e+00> : vector<256xf32>
    %20 = vector.multi_reduction <add>, %19, %cst_8 [0] : vector<4x256xf32> to vector<256xf32>
    %21 = vector.shape_cast %20 : vector<256xf32> to vector<1x256xf32>
    %cst_9 = arith.constant 0.000000e+00 : f32
    %22 = vector.broadcast %cst_9 : f32 to vector<4x256xf32>
    %23 = arith.select %17, %12, %22 : vector<4x256xi1>, vector<4x256xf32>
    %cst_10 = arith.constant dense<0.000000e+00> : vector<256xf32>
    %24 = vector.multi_reduction <add>, %23, %cst_10 [0] : vector<4x256xf32> to vector<256xf32>
    %25 = vector.shape_cast %24 : vector<256xf32> to vector<1x256xf32>
    %26 = arith.subf %21, %9 : vector<1x256xf32>
    %27 = math.log %14 : vector<1x256xf32>
    %28 = arith.subf %26, %27 : vector<1x256xf32>
    %29 = arith.divf %25, %14 : vector<1x256xf32>
    %c0_11 = arith.constant 0 : index
    %c0_12 = arith.constant 0 : index
    %30 = vector.load %arg4[%c0_11, %c0_12] : memref<4x128xf32, #tpu.memory_space<vmem>>, vector<4x128xf32>
    %31 = vector.extract_strided_slice %30 {offsets = [0, 0], sizes = [4, 1], strides = [1, 1]} : vector<4x128xf32> to vector<4x1xf32>
    %cst_13 = arith.constant 0.000000e+00 : f32
    %32 = vector.shape_cast %31 : vector<4x1xf32> to vector<4x1xf32>
    %33 = vector.broadcast %32 : vector<4x1xf32> to vector<4x256xf32>
    %34 = vector.broadcast %cst_13 : f32 to vector<4x256xf32>
    %35 = arith.select %17, %33, %34 : vector<4x256xi1>, vector<4x256xf32>
    %cst_14 = arith.constant dense<0.000000e+00> : vector<256xf32>
    %36 = vector.multi_reduction <add>, %35, %cst_14 [0] : vector<4x256xf32> to vector<256xf32>
    %37 = vector.shape_cast %36 : vector<256xf32> to vector<1x256xf32>
    %38 = arith.mulf %28, %37 : vector<1x256xf32>
    %cst_15 = arith.constant 1.000000e+00 : f32
    %39 = vector.broadcast %cst_15 : f32 to vector<1x256xf32>
    %40 = arith.subf %39, %29 : vector<1x256xf32>
    %cst_16 = arith.constant 0.000000e+00 : f32
    %41 = vector.broadcast %cst_16 : f32 to vector<1x256xf32>
    %42 = arith.maximumf %40, %41 : vector<1x256xf32>
    %43 = arith.mulf %42, %42 : vector<1x256xf32>
    %cst_17 = arith.constant -1.000000e+00 : f32
    %44 = vector.broadcast %cst_17 : f32 to vector<1x256xf32>
    %45 = arith.mulf %44, %43 : vector<1x256xf32>
    %46 = arith.mulf %45, %38 : vector<1x256xf32>
    %c0_18 = arith.constant 0 : index
    %c0_19 = arith.constant 0 : index
    %47 = vector.load %arg6[%c0_18, %c0_19] : memref<1x256xf32, #tpu.memory_space<vmem>>, vector<1x256xf32>
    %48 = arith.addf %47, %46 : vector<1x256xf32>
    %c0_20 = arith.constant 0 : index
    %c0_21 = arith.constant 0 : index
    %49 = vector.load %arg6[%c0_20, %c0_21] : memref<1x256xf32, #tpu.memory_space<vmem>>, vector<1x256xf32>
    tpu.vector_store %arg6[%c0_20, %c0_21], %48 {strides = array<i32>} : memref<1x256xf32, #tpu.memory_space<vmem>>, vector<1x256xf32>,
    %c0_i32_22 = arith.constant 0 : i32
    %50 = arith.cmpi eq, %arg1, %c0_i32_22 : i32
    %51 = arith.extui %50 : i1 to i32
    %c0_i32_23 = arith.constant 0 : i32
    %52 = arith.cmpi ne, %51, %c0_i32_23 : i32
    scf.if %52 {
      %c0_24 = arith.constant 0 : index
      %c0_25 = arith.constant 0 : index
      %53 = vector.load %arg6[%c0_24, %c0_25] : memref<1x256xf32, #tpu.memory_space<vmem>>, vector<1x256xf32>
      %54 = vector.shape_cast %53 : vector<1x256xf32> to vector<1x1x256xf32>
      %cst_26 = arith.constant dense<0.000000e+00> : vector<1xf32>
      %55 = vector.multi_reduction <add>, %54, %cst_26 [1, 2] : vector<1x1x256xf32> to vector<1xf32>
      %56 = vector.shape_cast %55 : vector<1xf32> to vector<1x1x1xf32>
      %57 = vector.extract %56[0, 0, 0] : f32 from vector<1x1x1xf32>
      %58 = vector.broadcast %57 : f32 to vector<8x128xf32>
      %c0_27 = arith.constant 0 : index
      %c0_28 = arith.constant 0 : index
      %c0_29 = arith.constant 0 : index
      %59 = vector.load %arg5[%c0_27, %c0_28, %c0_29] : memref<1x8x128xf32, #tpu.memory_space<vmem>>, vector<1x8x128xf32>
      %60 = vector.shape_cast %59 : vector<1x8x128xf32> to vector<8x128xf32>
      %61 = vector.shape_cast %58 : vector<8x128xf32> to vector<1x8x128xf32>
      tpu.vector_store %arg5[%c0_27, %c0_28, %c0_29], %61 {strides = array<i32>} : memref<1x8x128xf32, #tpu.memory_space<vmem>>, vector<1x8x128xf32>,
    } else {
    }
    return
  }
  func.func @transform_0(%arg0: i32, %arg1: i32) -> (i32, i32, i32) {
    %c0_i32 = arith.constant 0 : i32
    %c0_i32_0 = arith.constant 0 : i32
    return %arg0, %c0_i32, %arg1 : i32, i32, i32
  }
  func.func @transform_1(%arg0: i32, %arg1: i32) -> (i32, i32, i32) {
    %c0_i32 = arith.constant 0 : i32
    %c0_i32_0 = arith.constant 0 : i32
    return %arg0, %c0_i32, %arg1 : i32, i32, i32
  }
  func.func @transform_2(%arg0: i32, %arg1: i32) -> (i32, i32) {
    %c0_i32 = arith.constant 0 : i32
    %c0_i32_0 = arith.constant 0 : i32
    %c0_i32_1 = arith.constant 0 : i32
    return %c0_i32, %c0_i32_0 : i32, i32
  }
  func.func @transform_3(%arg0: i32, %arg1: i32) -> (i32, i32, i32) {
    %c0_i32 = arith.constant 0 : i32
    %c0_i32_0 = arith.constant 0 : i32
    %c0_i32_1 = arith.constant 0 : i32
    return %arg0, %c0_i32, %c0_i32_0 : i32, i32, i32
  }
}

</mosaic_0001>

<llo_original>
// kernel: tpu_custom_call.1
$region0: #{tpu_custom_call.1}
  #allocation0 [shape = 'u32[]', space=smem, size = 0x4, offset = 0x4, fixed_abs, tag = 'smem constant byte address 0x4 - core index']
  #allocation1 [shape = 'u32[144,128]{1,0:T(1,128)}', space=vmem, size = 0x12000, scoped, tag = 'internal scratch']
  #allocation2 [shape = 'f32[1,256]{1,0:T(1,128)}', space=vmem, size = 0x400, scoped, tag = 'scratch operand']
  %s0 = inlined_call_operand.hbm [shape: f32[2,4,256], index: 0, kind: input, shape index: {}]
  %s1 = inlined_call_operand.vmem [shape: s8[2,1,256], index: 1, kind: input, shape index: {}]
  %s2 = inlined_call_operand.vmem [shape: f32[4,128], index: 2, kind: input, shape index: {}]
  %s3 = inlined_call_operand.hbm [shape: f32[2,8,128], index: 3, kind: output, shape index: {}]
  %s4 = sld [smem:[#allocation0]]
  $region57: #{tpu_custom_call.1} parent=0
    _
  %s6 = ssub.s32 1, %s4
  %s7 = scalar_select 0, %s6, %s4
  $region1: #{tpu_custom_call.1} parent=0
    #allocation3 [shape = 'u8[8192]{0}', space=vmem, size = 0x2000, scoped, tag = 'input window, operand 0']
    #allocation4 [shape = 's32[2]{0}', space=sflag, size = 0x8, scoped, tag = 'scoped memory for tpu_custom_call.1']
    #allocation5 [shape = 's32[2]{0}', space=sflag, size = 0x8, scoped, tag = 'scoped memory for tpu_custom_call.1']
    #allocation6 [shape = 'u8[8192]{0}', space=vmem, size = 0x2000, scoped, tag = 'output window, operand 0']
    %8 = vsyncpa [#allocation4], 0
    %s9 = scalar_lea.sflag [#allocation4], 1
    %10 = vsyncpa %s9, 0
    %11 = vsyncpa [#allocation5], 0
    %s12 = scalar_lea.sflag [#allocation5], 1
    %13 = vsyncpa %s12, 0
    loop: start=0, step=1, limit=4
    $region2: #{tpu_custom_call.1} parent=1 // loop_pre_header
      _
    $region3: #{tpu_custom_call.1} parent=1 // loop_header
      %s15 = sphi 0, %s19
      %p16 = scmp.ge.s32.totalorder %s15, 4
      %s22 = sphi 0, %s34
      %s23 = sphi 0, %s30
      %s24 = sphi 0, %s22
      %s25 = sphi 0, %s23
      %s26 = sphi 0, %s24
      %s27 = sphi 0, %s25
      %s39 = sphi 0, %s41
      %s42 = sphi 0, %s39
      %s43 = sphi 0, %s42
      %s59 = sphi 0, %s43
      %s67 = sphi 0, %s69
      %s70 = sphi 0, %s67
      %s71 = sphi 0, %s70
      %s87 = sphi 0, %s71
      %s91 = sphi 0, %s91
      %s93 = sphi 0, %s91
      %s94 = sphi 0, %s93
      %s108 = sphi 0, %s94
      %s114 = sphi 0, %s116
      %s117 = sphi 0, %s114
      %s118 = sphi 0, %s117
      %s134 = sphi 0, %s118
    $region4: #{tpu_custom_call.1} parent=1 // loop_header_branch
      %18 = sbr.rel (%p16) target = $region8
    $region5: #{tpu_custom_call.1} parent=1 // loop_body
      %s20 = ssub.s32 %s15, 1
      %s21 = ssub.s32 %s15, 2
      %s28 = sadd.s32 1, %s23
      %p29 = scmp.ge.s32.totalorder %s28, 1
      %s30 = scalar_select %p29, 0, %s28
      %s31 = sadd.s32 1, %s22
      %s32 = scalar_select %p29, %s31, %s22
      %p33 = scmp.ge.s32.totalorder %s32, 2
      %s34 = scalar_select %p33, 0, %s32
      %s35 = ssub.s32 %s22, %s34
      %s36 = ssub.s32 %s23, %s30
      %s37 = sor.u32 %s35, %s36
      %p38 = scmp.eq.s32.totalorder %s37, 0
      %s40 = sadd.s32 %s39, 1
      %s41 = scalar_select %p38, %s39, %s40
      %p44 = pneg %p38
      %p45 = scmp.eq.s32.totalorder %s15, 1
      %p46 = por %p44, %p45
      %p47 = scmp.ne.s32.totalorder %s39, %s42
      %p48 = scmp.eq.s32.totalorder %s15, 0
      %p49 = por %p47, %p48
      %p50 = scmp.ne.s32.totalorder %s39, %s42
      %p51 = scmp.eq.s32.totalorder %s20, 1
      %p52 = por %p50, %p51
      %p53 = scmp.ne.s32.totalorder %s42, %s43
      %p54 = scmp.eq.s32.totalorder %s20, 0
      %p55 = por %p53, %p54
      %p56 = scmp.ne.s32.totalorder %s42, %s43
      %p57 = scmp.eq.s32.totalorder %s21, 1
      %p58 = por %p56, %p57
      %p60 = scmp.ne.s32.totalorder %s43, %s59
      %p61 = scmp.eq.s32.totalorder %s21, 0
      %p62 = por %p60, %p61
      %s63 = ssub.s32 %s22, %s34
      %s64 = ssub.s32 %s23, %s30
      %s65 = sor.u32 %s63, %s64
      %p66 = scmp.eq.s32.totalorder %s65, 0
      %s68 = sadd.s32 %s67, 1
      %s69 = scalar_select %p66, %s67, %s68
      %p72 = pneg %p66
      %p73 = scmp.eq.s32.totalorder %s15, 1
      %p74 = por %p72, %p73
      %p75 = scmp.ne.s32.totalorder %s67, %s70
      %p76 = scmp.eq.s32.totalorder %s15, 0
      %p77 = por %p75, %p76
      %p78 = scmp.ne.s32.totalorder %s67, %s70
      %p79 = scmp.eq.s32.totalorder %s20, 1
      %p80 = por %p78, %p79
      %p81 = scmp.ne.s32.totalorder %s70, %s71
      %p82 = scmp.eq.s32.totalorder %s20, 0
      %p83 = por %p81, %p82
      %p84 = scmp.ne.s32.totalorder %s70, %s71
      %p85 = scmp.eq.s32.totalorder %s21, 1
      %p86 = por %p84, %p85
      %p88 = scmp.ne.s32.totalorder %s71, %s87
      %p89 = scmp.eq.s32.totalorder %s21, 0
      %p90 = por %p88, %p89
      %s92 = sadd.s32 %s91, 1
      %p95 = scmp.eq.s32.totalorder %s15, 1
      %p96 = scmp.ne.s32.totalorder %s91, %s93
      %p97 = scmp.eq.s32.totalorder %s15, 0
      %p98 = por %p96, %p97
      %p99 = scmp.ne.s32.totalorder %s91, %s93
      %p100 = scmp.eq.s32.totalorder %s20, 1
      %p101 = por %p99, %p100
      %p102 = scmp.ne.s32.totalorder %s93, %s94
      %p103 = scmp.eq.s32.totalorder %s20, 0
      %p104 = por %p102, %p103
      %p105 = scmp.ne.s32.totalorder %s93, %s94
      %p106 = scmp.eq.s32.totalorder %s21, 1
      %p107 = por %p105, %p106
      %p109 = scmp.ne.s32.totalorder %s94, %s108
      %p110 = scmp.eq.s32.totalorder %s21, 0
      %p111 = por %p109, %p110
      %s112 = ssub.s32 %s22, %s34
      %p113 = scmp.eq.s32.totalorder %s112, 0
      %s115 = sadd.s32 %s114, 1
      %s116 = scalar_select %p113, %s114, %s115
      %p119 = pneg %p113
      %p120 = scmp.eq.s32.totalorder %s15, 1
      %p121 = por %p119, %p120
      %p122 = scmp.ne.s32.totalorder %s114, %s117
      %p123 = scmp.eq.s32.totalorder %s15, 0
      %p124 = por %p122, %p123
      %p125 = scmp.ne.s32.totalorder %s114, %s117
      %p126 = scmp.eq.s32.totalorder %s20, 1
      %p127 = por %p125, %p126
      %p128 = scmp.ne.s32.totalorder %s117, %s118
      %p129 = scmp.eq.s32.totalorder %s20, 0
      %p130 = por %p128, %p129
      %p131 = scmp.ne.s32.totalorder %s117, %s118
      %p132 = scmp.eq.s32.totalorder %s21, 1
      %p133 = por %p131, %p132
      %p135 = scmp.ne.s32.totalorder %s118, %s134
      %p136 = scmp.eq.s32.totalorder %s21, 0
      %p137 = por %p135, %p136
      %p138 = scmp.le.s32.totalorder 1, %s15
      %p139 = scmp.lt.s32.totalorder %s15, 3
      %p140 = pnand %p138, %p139
      %p141 = pneg %p140
      // Predicated region
      $region9: #{tpu_custom_call.1} parent=5 // pred_check
        _
      $region10: #{tpu_custom_call.1} parent=5 // pred_check_branch
        %143 = sbr.rel (%p140) target = $region12
      $region11: #{tpu_custom_call.1} parent=5 // pred_region
        %s144 = ssub.s32 %s15, 1
        // Predicated region
        $region13: #{tpu_custom_call.1} parent=11 // pred_check
          %p145 = pneg %p104
        $region14: #{tpu_custom_call.1} parent=11 // pred_check_branch
          %147 = sbr.rel (%p145) target = $region16
        $region15: #{tpu_custom_call.1} parent=11 // pred_region
          _
        $region16: #{tpu_custom_call.1} parent=11 // pred_fallthru
          _
      $region12: #{tpu_custom_call.1} parent=5 // pred_fallthru
        _
      %p148 = scmp.lt.s32.totalorder %s15, 2
      // Predicated region
      $region17: #{tpu_custom_call.1} parent=5 // pred_check
        %p149 = pneg %p148
      $region18: #{tpu_custom_call.1} parent=5 // pred_check_branch
        %151 = sbr.rel (%p149) target = $region20
      $region19: #{tpu_custom_call.1} parent=5 // pred_region
        // Predicated region
        $region21: #{tpu_custom_call.1} parent=19 // pred_check
          %p152 = pneg %p49
        $region22: #{tpu_custom_call.1} parent=19 // pred_check_branch
          %154 = sbr.rel (%p152) target = $region24
        $region23: #{tpu_custom_call.1} parent=19 // pred_region
          %s155 = sand.u32 %s39, 1
          %s156 = scalar_lea.sflag [#allocation4], %s155
          %s157 = sand.u32 %s39, 1
          %s158 = smul.addr %s157, 8
          %s159 = scalar_lea.vmem [#allocation3], %s158
          %s160 = smul.u32 2, %s23
          %s162 = ssub.s32 128, 128
          %163 = vsyncadd %s156, %s162
          %s164 = smul.addr %s22, 2
          %s165 = sadd.s32 %s160, %s164
          %s166 = smul.addr %s165, 64
          %s167 = scalar_lea.hbm %s0, %s166
          %s169 = sshll.u32 %s159, 4
          %s170 = int_to_ptr.vmem [resolvable:$true] %s169
          %172 = dma.hbm_to_vmem [thread:$0]  %s167, 128, %s170, %s156
        $region24: #{tpu_custom_call.1} parent=19 // pred_fallthru
          _
        // Predicated region
        $region25: #{tpu_custom_call.1} parent=19 // pred_check
          %p173 = pneg %p77
        $region26: #{tpu_custom_call.1} parent=19 // pred_check_branch
          %175 = sbr.rel (%p173) target = $region28
        $region27: #{tpu_custom_call.1} parent=19 // pred_region
          %s176 = smul.u32 2, %s23
          %p177 = scmp.lt.s32.totalorder %s22, 1
          %s178 = scalar_select %p177, %s22, 1
          %p179 = scmp.lt.s32.totalorder %s176, 1
          %s180 = scalar_select %p179, %s176, 1
          %s181 = smul.addr %s178, 2
          %s182 = sadd.s32 %s180, %s181
          %s183 = scalar_lea.vmem %s1, %s182
          %s184 = smul.u32 2, %s23
        $region28: #{tpu_custom_call.1} parent=19 // pred_fallthru
          _
      $region20: #{tpu_custom_call.1} parent=5 // pred_fallthru
        _
      %p185 = scmp.le.s32.totalorder 1, %s15
      %p186 = scmp.lt.s32.totalorder %s15, 3
      %p187 = pnand %p185, %p186
      %p188 = pneg %p187
      // Predicated region
      $region29: #{tpu_custom_call.1} parent=5 // pred_check
        _
      $region30: #{tpu_custom_call.1} parent=5 // pred_check_branch
        %190 = sbr.rel (%p187) target = $region32
      $region31: #{tpu_custom_call.1} parent=5 // pred_region
        %s191 = ssub.s32 %s15, 1
        %s192 = sand.u32 %s42, 1
        %s193 = scalar_lea.sflag [#allocation4], %s192
        %s194 = sand.u32 %s42, 1
        %s195 = smul.addr %s194, 8
        %s196 = scalar_lea.vmem [#allocation3], %s195
        // Predicated region
        $region33: #{tpu_custom_call.1} parent=31 // pred_check
          %p197 = pneg %p55
        $region34: #{tpu_custom_call.1} parent=31 // pred_check_branch
          %199 = sbr.rel (%p197) target = $region36
        $region35: #{tpu_custom_call.1} parent=31 // pred_region
          %200 = dma.done %s193, 128
        $region36: #{tpu_custom_call.1} parent=31 // pred_fallthru
          _
        %s201 = sand.u32 %s42, 1
        %s202 = scalar_lea.sflag [#allocation4], %s201
        %s203 = sand.u32 %s42, 1
        %s204 = smul.addr %s203, 8
        %s205 = scalar_lea.vmem [#allocation3], %s204
        %p206 = pneg %p55
        %p207 = pneg %p52
        %s208 = smul.u32 2, %s25
        %p209 = scmp.lt.s32.totalorder %s24, 1
        %s210 = scalar_select %p209, %s24, 1
        %p211 = scmp.lt.s32.totalorder %s208, 1
        %s212 = scalar_select %p211, %s208, 1
        %s213 = smul.addr %s210, 2
        %s214 = sadd.s32 %s212, %s213
        %s215 = scalar_lea.vmem %s1, %s214
        %p216 = pneg %p83
        %p217 = pneg %p80
        %p218 = pneg %p104
        %p219 = pneg %p101
        %p220 = pneg %p130
        %p221 = pneg %p127
        %s222 = sand.u32 %s117, 1
        %s223 = scalar_lea.sflag [#allocation5], %s222
        %s224 = sand.u32 %s117, 1
        %s225 = smul.addr %s224, 8
        %s226 = scalar_lea.vmem [#allocation6], %s225
        %s227 = smul.u32 2, %s25
        %s228 = smul.u32 2, %s25
        %p229 = scmp.lt.s32.totalorder %s24, 1
        %s230 = scalar_select %p229, %s24, 1
        %p231 = scmp.lt.s32.totalorder %s228, 1
        %s232 = scalar_select %p231, %s228, 1
        %s233 = smul.addr %s230, 2
        %s234 = sadd.s32 %s232, %s233
        %s235 = scalar_lea.vmem %s1, %s234
        %s236 = smul.u32 2, %s25
        %p237 = scmp.eq.s32.totalorder %s25, 0
        // Predicated region
        $region37: #{tpu_custom_call.1} parent=31 // pred_check
          %p238 = pneg %p237
        $region38: #{tpu_custom_call.1} parent=31 // pred_check_branch
          %240 = sbr.rel (%p238) target = $region40
        $region39: #{tpu_custom_call.1} parent=31 // pred_region
          %v241 = vlaneseq
          %vm242 = vcmp.ge.s32.totalorder %v241, 0
          %vm243 = vcmp.lt.s32.totalorder %v241, 256
          %vm244 = vmand %vm242, %vm243
          %245 = vst.msk [vmem:[#allocation2] sm:$0x3] %vm244, 0.0
        $region40: #{tpu_custom_call.1} parent=31 // pred_fallthru
          _
        %v246 = vld [vmem:[%s196] sm:$0xff]
        %v247 = vld [vmem:[%s235] sm:$0x3]
        %v248 = vunpack.c.0.s8 %v247
        %v250 = vcombine.high %v246, %v246
        %vm252 = vcmask 1043456
        %v253 = vsel %vm252, %v246, -inf
        %v254 = vrot.slane %v253, 4
        %v255 = vmax.f32 %v253, %v254
        %v256 = vrot.slane %v255, 2
        %v257 = vmax.f32 %v255, %v256
        %v258 = vrot.slane %v257, 1
        %v259 = vmax.f32 %v257, %v258
        %v260 = vsel %vm252, %v250, -inf
        %v261 = vrot.slane %v260, 4
        %v262 = vmax.f32 %v260, %v261
        %v263 = vrot.slane %v262, 2
        %v264 = vmax.f32 %v262, %v263
        %v265 = vrot.slane %v264, 1
        %v266 = vmax.f32 %v264, %v265
        %v269 = vcombine.low %v259, %v266
        %v271 = vsub.f32 %v246, %v269
        %v272 = vmul.f32 %v271, 1.442695
        %v273 = vpow.pop %v272
        %v275 = vcombine.high %v273, %v273
        %v277 = vsel %vm252, %v273, 0.0
        %v278 = vrot.slane %v277, 4
        %v279 = vadd.f32 %v277, %v278
        %v280 = vrot.slane %v279, 2
        %v281 = vadd.f32 %v279, %v280
        %v282 = vrot.slane %v281, 1
        %v283 = vadd.f32 %v281, %v282
        %v284 = vsel %vm252, %v275, 0.0
        %v285 = vrot.slane %v284, 4
        %v286 = vadd.f32 %v284, %v285
        %v287 = vrot.slane %v286, 2
        %v288 = vadd.f32 %v286, %v287
        %v289 = vrot.slane %v288, 1
        %v290 = vadd.f32 %v288, %v289
        %v291 = vlaneseq
        %v292 = vshrl.u32 %v291, 7
        %v293 = vlaneseq
        %v294 = vshrl.u32 %v293, 7
        %v295 = vsub.s32 0, %v294
        %v296 = vrot.slane %v248, %v295
        %v297 = vlaneseq
        %v298 = vshrl.u32 %v297, 7
        %v299 = vsub.s32 4, %v298
        %v300 = vrot.slane %v248, %v299
        %v301 = vlaneseq
        %v302 = vshrl.u32 %v301, 7
        %v303 = vsub.s32 0, %v302
        %v304 = vrot.slane %v296, %v303
        %v305 = vlaneseq
        %v306 = vshrl.u32 %v305, 7
        %v307 = vsub.s32 0, %v306
        %v308 = vrot.slane %v300, %v307
        %vm309 = vcmp.eq.s32.totalorder %v292, %v304
        %vm310 = vcmp.eq.s32.totalorder %v292, %v308
        %v311 = vsel %vm309, %v246, 0.0
        %v312 = vsel %vm310, %v250, 0.0
        %v313 = vsel %vm252, %v311, 0.0
        %v314 = vrot.slane %v313, 4
        %v315 = vadd.f32 %v313, %v314
        %v316 = vrot.slane %v315, 2
        %v317 = vadd.f32 %v315, %v316
        %v318 = vrot.slane %v317, 1
        %v319 = vadd.f32 %v317, %v318
        %v320 = vsel %vm252, %v312, 0.0
        %v321 = vrot.slane %v320, 4
        %v322 = vadd.f32 %v320, %v321
        %v323 = vrot.slane %v322, 2
        %v324 = vadd.f32 %v322, %v323
        %v325 = vrot.slane %v324, 1
        %v326 = vadd.f32 %v324, %v325
        %v327 = vsel %vm309, %v273, 0.0
        %v328 = vsel %vm310, %v275, 0.0
        %v329 = vsel %vm252, %v327, 0.0
        %v330 = vrot.slane %v329, 4
        %v331 = vadd.f32 %v329, %v330
        %v332 = vrot.slane %v331, 2
        %v333 = vadd.f32 %v331, %v332
        %v334 = vrot.slane %v333, 1
        %v335 = vadd.f32 %v333, %v334
        %v336 = vsel %vm252, %v328, 0.0
        %v337 = vrot.slane %v336, 4
        %v338 = vadd.f32 %v336, %v337
        %v339 = vrot.slane %v338, 2
        %v340 = vadd.f32 %v338, %v339
        %v341 = vrot.slane %v340, 1
        %v342 = vadd.f32 %v340, %v341
        %v343 = vsub.f32 %v319, %v259
        %v344 = vsub.f32 %v326, %v266
        %v345 = vlog2.pop %v283
        %v346 = vmul.f32 %v345, 0.6931472
        %v347 = vlog2.pop %v290
        %v348 = vmul.f32 %v347, 0.6931472
        %v349 = vsub.f32 %v343, %v346
        %v350 = vsub.f32 %v344, %v348
        %v351 = vrcp.pop %v283
        %v352 = vmul.f32 %v335, %v351
        %v353 = vrcp.pop %v290
        %v354 = vmul.f32 %v342, %v353
        %v355 = vld [vmem:[%s2] sm:$0xf]
        %357 = vset.pattern.permute.xlu0 0
        %358 = vperm.xlu0 %357, %v355
        %v359 = vpop.permute.xlu0 %358
        %v361 = vsel %vm309, %v359, 0.0
        %v362 = vsel %vm310, %v359, 0.0
        %v363 = vsel %vm252, %v361, 0.0
        %v364 = vrot.slane %v363, 4
        %v365 = vadd.f32 %v363, %v364
        %v366 = vrot.slane %v365, 2
        %v367 = vadd.f32 %v365, %v366
        %v368 = vrot.slane %v367, 1
        %v369 = vadd.f32 %v367, %v368
        %v370 = vsel %vm252, %v362, 0.0
        %v371 = vrot.slane %v370, 4
        %v372 = vadd.f32 %v370, %v371
        %v373 = vrot.slane %v372, 2
        %v374 = vadd.f32 %v372, %v373
        %v375 = vrot.slane %v374, 1
        %v376 = vadd.f32 %v374, %v375
        %v377 = vmul.f32 %v349, %v369
        %v378 = vmul.f32 %v350, %v376
        %v379 = vsub.f32 1.0, %v352
        %v380 = vsub.f32 1.0, %v354
        %v381 = vmax.f32 %v379, 0.0
        %v382 = vmax.f32 %v380, 0.0
        %v383 = vmul.f32 %v381, %v381
        %v384 = vmul.f32 %v382, %v382
        %v385 = vmul.f32 %v383, -1.0
        %v386 = vmul.f32 %v384, -1.0
        %v387 = vmul.f32 %v385, %v377
        %v388 = vmul.f32 %v386, %v378
        %v389 = vld [vmem:[#allocation2] sm:$0x3]
        %v392 = vcombine.low %v387, %v388
        %v394 = vunpack.c.l.s4 1966171168
        %v395 = vunpack.c.0.s8 %v394
        %v396 = vlaneseq
        %v397 = vshrl.u32 %v396, 7
        %v398 = vsub.s32 %v395, %v397
        %v399 = vrot.slane %v392, %v398
        %v401 = vunpack.c.l.s4 1966171168
        %v402 = vunpack.c.0.s8 %v401
        %v403 = vlaneseq
        %v404 = vshrl.u32 %v403, 7
        %v405 = vsub.s32 %v402, %v404
        %v406 = vrot.slane %v399, %v405
        %v408 = vadd.f32 %v389, %v406
        %v409 = vlaneseq
        %vm410 = vcmp.ge.s32.totalorder %v409, 0
        %vm411 = vcmp.lt.s32.totalorder %v409, 256
        %vm412 = vmand %vm410, %vm411
        %413 = vst.msk [vmem:[#allocation2] sm:$0x3] %vm412, %v408
        // Predicated region
        $region41: #{tpu_custom_call.1} parent=31 // pred_check
          %p414 = pneg %p237
        $region42: #{tpu_custom_call.1} parent=31 // pred_check_branch
          %416 = sbr.rel (%p414) target = $region44
        $region43: #{tpu_custom_call.1} parent=31 // pred_region
          %v417 = vld [vmem:[#allocation2] sm:$0x3]
          %v419 = vlaneseq
          %v420 = vshrl.u32 %v419, 7
          %v421 = vsub.s32 0, %v420
          %v422 = vrot.slane %v417, %v421
          %v423 = vlaneseq
          %v424 = vshrl.u32 %v423, 7
          %v425 = vsub.s32 1, %v424
          %v426 = vrot.slane %v417, %v425
          %vm429 = vcmask 1040384
          %v430 = vsel %vm429, %v422, 0.0
          %v431 = vsel %vm429, %v426, 0.0
          %v432 = vadd.f32 %v430, %v431
          %433 = vadd.xlane.f32.xlu0 %v432
          %v434 = vpop.xlane.xlu0 %433
          %v435 = vrot.slane %v434, 4
          %v436 = vadd.f32 %v434, %v435
          %v437 = vrot.slane %v436, 2
          %v438 = vadd.f32 %v436, %v437
          %v439 = vrot.slane %v438, 1
          %v440 = vadd.f32 %v438, %v439
          %s441 = vtos %v440
          %v442 = vstv %s441
          %443 = vst [vmem:[%s226] sm:$0xff] %v442
        $region44: #{tpu_custom_call.1} parent=31 // pred_fallthru
          _
        %s444 = sand.u32 %s117, 1
        %s445 = scalar_lea.sflag [#allocation5], %s444
        %s446 = sand.u32 %s117, 1
        %s447 = smul.addr %s446, 8
        %s448 = scalar_lea.vmem [#allocation6], %s447
        // Predicated region
        $region45: #{tpu_custom_call.1} parent=31 // pred_check
          %p449 = pneg %p127
        $region46: #{tpu_custom_call.1} parent=31 // pred_check_branch
          %451 = sbr.rel (%p449) target = $region48
        $region47: #{tpu_custom_call.1} parent=31 // pred_region
          %s453 = ssub.s32 128, 128
          %454 = vsyncadd %s445, %s453
          %s455 = smul.addr %s24, 128
          %s456 = scalar_lea.hbm %s3, %s455
          %s458 = sshll.u32 %s448, 4
          %s459 = int_to_ptr.vmem [resolvable:$true] %s458
          %461 = dma.vmem_to_hbm [thread:$0]  %s459, 128, %s456, %s445
        $region48: #{tpu_custom_call.1} parent=31 // pred_fallthru
          _
      $region32: #{tpu_custom_call.1} parent=5 // pred_fallthru
        _
      %p462 = scmp.le.s32.totalorder 2, %s15
      // Predicated region
      $region49: #{tpu_custom_call.1} parent=5 // pred_check
        %p463 = pneg %p462
      $region50: #{tpu_custom_call.1} parent=5 // pred_check_branch
        %465 = sbr.rel (%p463) target = $region52
      $region51: #{tpu_custom_call.1} parent=5 // pred_region
        %s466 = ssub.s32 %s15, 2
        // Predicated region
        $region53: #{tpu_custom_call.1} parent=51 // pred_check
          %p467 = pneg %p133
        $region54: #{tpu_custom_call.1} parent=51 // pred_check_branch
          %469 = sbr.rel (%p467) target = $region56
        $region55: #{tpu_custom_call.1} parent=51 // pred_region
          %s470 = sand.u32 %s118, 1
          %s471 = scalar_lea.sflag [#allocation5], %s470
          %s472 = sand.u32 %s118, 1
          %s473 = smul.addr %s472, 8
          %s474 = scalar_lea.vmem [#allocation6], %s473
          %475 = dma.done %s471, 128
        $region56: #{tpu_custom_call.1} parent=51 // pred_fallthru
          _
      $region52: #{tpu_custom_call.1} parent=5 // pred_fallthru
        _
    $region6: #{tpu_custom_call.1} parent=1 // loop_footer
      %s19 = sadd.s32 1, %s15
    $region7: #{tpu_custom_call.1} parent=1 // loop_footer_branch
      %14 = sbr.rel target = $region3
    $region8: #{tpu_custom_call.1} parent=1 // loop_exit
      _
    %476 = vsyncpa [#allocation4], 1
    %s477 = scalar_lea.sflag [#allocation4], 1
    %478 = vsyncpa %s477, 1
    %479 = vsyncpa [#allocation5], 1
    %s480 = scalar_lea.sflag [#allocation5], 1
    %481 = vsyncpa %s480, 1

</llo_original>
